<compile_context>
chip_gen: v7x
topology: tpu7x:2x2x1
jax: 0.10.0
libtpu: 0.0.40
codegen_flags: <defaults>
</compile_context>

<pallas_src>
import math
import jax
import jax.numpy as jnp
from jax.experimental import pallas as pl
from jax.experimental.pallas import tpu as pltpu


LANES = 128
# ~2 MiB per block (per buffer). Safe across v5e/v6e/v7x with double
# buffering, big enough that the kernel is HBM-bandwidth bound, small enough
# that large tensors still produce a multi-step parallel grid (v7x 2-TC split).
_TARGET_BLOCK_BYTES = 2 * 1024 * 1024


def _copy_kernel(x_ref, o_ref):
    # Identity copy of one (tile_rows, 128) tile through VMEM.
    o_ref[...] = x_ref[...]


def _resolve_dims(total, dims):
    """PyTorch-style reshape dim resolution (supports a single -1)."""
    dims = list(dims)
    if dims.count(-1) > 1:
        raise ValueError("only one dimension can be -1")
    if -1 in dims:
        known = 1
        for d in dims:
            if d != -1:
                known *= d
        if known == 0 or total % known != 0:
            raise ValueError(f"cannot reshape {total} elements into {dims}")
        dims[dims.index(-1)] = total // known
    if math.prod(dims) != total:
        raise ValueError(f"cannot reshape {total} elements into {dims}")
    return tuple(dims)


def _pallas_copy_2d(x2d):
    """Identity copy of a lane-dense (rows, 128) slab through a Pallas kernel."""
    rows, _ = x2d.shape
    itemsize = jnp.dtype(x2d.dtype).itemsize
    row_bytes = LANES * itemsize

    # Block sized to ~2 MiB; multiple of 32 rows so it stays (8,128)-aligned
    # for every sublane packing (f32 / bf16 / int8).
    tile_rows = max(32, (_TARGET_BLOCK_BYTES // row_bytes) // 32 * 32)
    if tile_rows >= rows:
        tile_rows = rows  # single block == full array dims (always legal)
    # cdiv grid: Pallas masks the ragged last block -- no divisor search.
    grid = (pl.cdiv(rows, tile_rows),)

    return pl.pallas_call(
        _copy_kernel,
        out_shape=jax.ShapeDtypeStruct((rows, LANES), x2d.dtype),
        grid_spec=pltpu.PrefetchScalarGridSpec(
            num_scalar_prefetch=0,
            grid=grid,
            in_specs=[pl.BlockSpec((tile_rows, LANES), lambda i: (i, 0))],
            out_specs=pl.BlockSpec((tile_rows, LANES), lambda i: (i, 0)),
        ),
        compiler_params=pltpu.CompilerParams(
            dimension_semantics=("parallel",),
        ),
        # Pure memory op: read + write of the slab, zero flops.
        cost_estimate=pl.CostEstimate(
            flops=0,
            transcendentals=0,
            bytes_accessed=2 * rows * LANES * itemsize,
        ),
    )(x2d)


def pallas_reshape(x, *dim, copy=False):
    """Equivalent of Reshape(*dim)(x) == x.reshape(*dim).

    copy=False (default): metadata-only reshape, no kernel, no HBM traffic.
    copy=True: materialize the result through the Pallas copy kernel.
    """
    total = x.size
    out_dims = _resolve_dims(total, dim)

    if not copy or total == 0:
        # Contiguous reshape is metadata-only -> bypass the kernel entirely.
        return x.reshape(out_dims)

    flat = x.reshape(-1)
    aligned = (total // LANES) * LANES  # 128-aligned prefix, no zero-pad
    pieces = []
    if aligned:
        rows = aligned // LANES
        y2d = _pallas_copy_2d(flat[:aligned].reshape(rows, LANES))
        pieces.append(y2d.reshape(-1))
    if aligned != total:
        # <128-element tail: pass through directly instead of padding the
        # whole tensor and slicing it back (saves a full extra read + write).
        pieces.append(flat[aligned:])
    flat_out = pieces[0] if len(pieces) == 1 else jnp.concatenate(pieces)
    return flat_out.reshape(out_dims)


if __name__ == "__main__":
    key = jax.random.PRNGKey(0)

    # NCHW feature map consistent with typical vmamba usage.
    x = jax.random.normal(key, (2, 4, 16, 16), dtype=jnp.float32)
    target_dim = (2, 4, -1)
    y_ref = x.reshape(2, 4, -1)

    # 1) Default fast path: metadata-only reshape (no kernel, no HBM traffic).
    y_fast = pallas_reshape(x, *target_dim)
    jax.block_until_ready(y_fast)
    assert y_fast.shape == y_ref.shape and y_fast.dtype == y_ref.dtype
    assert jnp.array_equal(y_fast, y_ref)

    # 2) Materializing path: runs the Pallas copy kernel (128-aligned total).
    y = pallas_reshape(x, *target_dim, copy=True)
    jax.block_until_ready(y)
    assert y.shape == y_ref.shape and y.dtype == y_ref.dtype
    assert jnp.array_equal(y, y_ref)

    # 3) Unaligned total (210 elements): kernel on the 128-aligned prefix plus
    #    a tiny pass-through tail -- no host-side zero-pad / slice-back.
    x2 = jax.random.normal(jax.random.PRNGKey(1), (2, 3, 5, 7), dtype=jnp.float32)
    y2 = pallas_reshape(x2, 6, -1, copy=True)
    jax.block_until_ready(y2)
    assert jnp.array_equal(y2, x2.reshape(6, -1))

    print("KERNEL_OK")
</pallas_src>

<mosaic_0001>
module attributes {stable_mosaic.version = 11 : i64} {
  func.func @_copy_kernel(%arg0: i32, %arg1: memref<16x128xf32, #tpu.memory_space<vmem>>, %arg2: memref<16x128xf32, #tpu.memory_space<vmem>>) attributes {dimension_semantics = [#tpu.dimension_semantics<parallel>], iteration_bounds = array<i64: 1>, scalar_prefetch = 0 : i64, scratch_operands = 0 : i64, tpu.core_type = #tpu.core_type<tc>, window_params = [{transform_indices = @transform_0, window_bounds = array<i64: 16, 128>}, {transform_indices = @transform_1, window_bounds = array<i64: 16, 128>}]} {
    %c0 = arith.constant 0 : index
    %c0_0 = arith.constant 0 : index
    %0 = vector.load %arg1[%c0, %c0_0] : memref<16x128xf32, #tpu.memory_space<vmem>>, vector<16x128xf32>
    %c0_1 = arith.constant 0 : index
    %c0_2 = arith.constant 0 : index
    %1 = vector.load %arg2[%c0_1, %c0_2] : memref<16x128xf32, #tpu.memory_space<vmem>>, vector<16x128xf32>
    tpu.vector_store %arg2[%c0_1, %c0_2], %0 {strides = array<i32>} : memref<16x128xf32, #tpu.memory_space<vmem>>, vector<16x128xf32>,
    return
  }
  func.func @transform_0(%arg0: i32) -> (i32, i32) {
    %c0_i32 = arith.constant 0 : i32
    %c0_i32_0 = arith.constant 0 : i32
    return %arg0, %c0_i32 : i32, i32
  }
  func.func @transform_1(%arg0: i32) -> (i32, i32) {
    %c0_i32 = arith.constant 0 : i32
    %c0_i32_0 = arith.constant 0 : i32
    return %arg0, %c0_i32 : i32, i32
  }
}

</mosaic_0001>

<llo_original>
// kernel: tpu_custom_call.1
$region0: #{tpu_custom_call.1}
  #allocation0 [shape = 'u32[]', space=smem, size = 0x4, offset = 0x4, fixed_abs, tag = 'smem constant byte address 0x4 - core index']
  #allocation1 [shape = 'u32[144,128]{1,0:T(1,128)}', space=vmem, size = 0x12000, scoped, tag = 'internal scratch']
  %s0 = inlined_call_operand.hbm [shape: f32[16,128], index: 0, kind: input, shape index: {}]
  %s1 = inlined_call_operand.hbm [shape: f32[16,128], index: 1, kind: output, shape index: {}]
  %s2 = sld [smem:[#allocation0]]
  $region18: #{tpu_custom_call.1} parent=0
    _
  %s4 = ssub.s32 1, %s2
  %s5 = scalar_select 0, %s4, %s2
  $region1: #{tpu_custom_call.1} parent=0
    #allocation2 [shape = 'u8[8192]{0}', space=vmem, size = 0x2000, scoped, tag = 'input window, operand 0, single buffered']
    #allocation3 [shape = 's32[1]{0}', space=sflag, size = 0x4, scoped, tag = 'scoped memory for tpu_custom_call.1']
    #allocation4 [shape = 's32[1]{0}', space=sflag, size = 0x4, scoped, tag = 'scoped memory for tpu_custom_call.1']
    #allocation5 [shape = 'u8[8192]{0}', space=vmem, size = 0x2000, scoped, tag = 'output window, operand 0, single buffered']
    %6 = vsyncpa [#allocation3], 0
    %7 = vsyncpa [#allocation4], 0
    // Predicated region
    $region2: #{tpu_custom_call.1} parent=1 // pred_check
      _
    $region3: #{tpu_custom_call.1} parent=1 // pred_check_branch
      %9 = sbr.rel (0) target = $region5
    $region4: #{tpu_custom_call.1} parent=1 // pred_region
      %s11 = ssub.s32 256, 256
      %12 = vsyncadd [#allocation3], %s11
      %s13 = sshll.u32 [#allocation2], 4
      %s14 = int_to_ptr.vmem [resolvable:$true] %s13
      %19 = dma.hbm_to_vmem [thread:$0]  %s0, 256, %s14, [#allocation3], 128, 128, 8
    $region5: #{tpu_custom_call.1} parent=1 // pred_fallthru
      _
    // Predicated region
    $region6: #{tpu_custom_call.1} parent=1 // pred_check
      _
    $region7: #{tpu_custom_call.1} parent=1 // pred_check_branch
      %21 = sbr.rel (0) target = $region9
    $region8: #{tpu_custom_call.1} parent=1 // pred_region
      %22 = dma.done [#allocation3], 256
    $region9: #{tpu_custom_call.1} parent=1 // pred_fallthru
      _
    %v23 = vld [vmem:[#allocation2] sm:$0xff]
    %v24 = vld [vmem:[#allocation2 + $0x8] sm:$0xff]
    %25 = vst [vmem:[#allocation5] sm:$0xff] %v23
    %26 = vst [vmem:[#allocation5 + $0x8] sm:$0xff] %v24
    // Predicated region
    $region10: #{tpu_custom_call.1} parent=1 // pred_check
      _
    $region11: #{tpu_custom_call.1} parent=1 // pred_check_branch
      %28 = sbr.rel (0) target = $region13
    $region12: #{tpu_custom_call.1} parent=1 // pred_region
      %s30 = ssub.s32 256, 256
      %31 = vsyncadd [#allocation4], %s30
      %s32 = sshll.u32 [#allocation5], 4
      %s33 = int_to_ptr.vmem [resolvable:$true] %s32
      %38 = dma.vmem_to_hbm [thread:$0]  %s33, 256, %s1, [#allocation4], 128, 128, 8
    $region13: #{tpu_custom_call.1} parent=1 // pred_fallthru
      _
    // Predicated region
    $region14: #{tpu_custom_call.1} parent=1 // pred_check
      _
    $region15: #{tpu_custom_call.1} parent=1 // pred_check_branch
      %40 = sbr.rel (0) target = $region17
    $region16: #{tpu_custom_call.1} parent=1 // pred_region
      %41 = dma.done [#allocation4], 256
    $region17: #{tpu_custom_call.1} parent=1 // pred_fallthru
      _
    %42 = vsyncpa [#allocation3], 1
    %43 = vsyncpa [#allocation4], 1

</llo_original>
